<compile_context>
chip_gen: v7x
topology: tpu7x:2x2x1
jax: 0.10.0
libtpu: 0.0.40
codegen_flags: <defaults>
</compile_context>

<pallas_src>
import jax
import jax.numpy as jnp
from jax.experimental import pallas as pl
from jax.experimental.pallas import tpu as pltpu


def _roundup(a, m):
    return -(-a // m) * m


def _choose_batch_pack(N, C, sublane_target):
    """Smallest divisor B of N with B*C >= sublane_target (falls back to N)."""
    target = max(1, -(-sublane_target // C))
    for b in range(target, N + 1):
        if N % b == 0:
            return b
    return N


def _vmem_capacity_bytes():
    """Per-generation physical VMEM size; conservative fallback if unqueryable."""
    try:
        info = pltpu.get_tpu_info()
        cap = getattr(info, "vmem_capacity_bytes", None)
        if cap:
            return int(cap)
    except Exception:
        pass
    return 64 * 1024 * 1024   # v7x per-core size == smallest current generation


def _make_kernel(B, C, H_in, W_in):
    half_w = 0.5 * float(W_in)
    half_h = 0.5 * float(H_in)
    off_x = 0.5 * float(W_in - 1)
    off_y = 0.5 * float(H_in - 1)

    def kernel(theta_ref, w_coord_ref, h_coord_ref, xw_ref, yh_ref, x_ref, o_ref):
        nb = pl.program_id(0)

        w_coord = w_coord_ref[...]    # (W_in, 1) integer-valued input column coords
        h_coord = h_coord_ref[...]    # (H_in, 1) integer-valued input row coords
        xw = xw_ref[...]              # (1, T)    normalized output x coords
        yh = yh_ref[...]              # (1, T)    normalized output y coords

        for b in range(B):            # B is small and static (unrolled)
            base = (nb * B + b) * 6
            t00 = theta_ref[base + 0]
            t01 = theta_ref[base + 1]
            t02 = theta_ref[base + 2]
            t10 = theta_ref[base + 3]
            t11 = theta_ref[base + 4]
            t12 = theta_ref[base + 5]

            # Fold affine_grid + grid_sample unnormalization into per-batch scalars
            # (rides the free scalar-ALU slots).
            ax = half_w * t00
            bx = half_w * t01
            cx = half_w * t02 + off_x
            ay = half_h * t10
            by = half_h * t11
            cy = half_h * t12 + off_y

            ix = ax * xw + bx * yh + cx   # (1, T) source x coord per output pixel
            iy = ay * xw + by * yh + cy   # (1, T) source y coord per output pixel

            # Separable bilinear hat weights on the reduced (W_in,T)/(H_in,T) planes;
            # out-of-range source pixels naturally get weight 0 (padding_mode='zeros').
            wx = jnp.maximum(1.0 - jnp.abs(ix - w_coord), 0.0)    # (W_in, T)
            wy = jnp.maximum(1.0 - jnp.abs(iy - h_coord), 0.0)    # (H_in, T)

            xb = x_ref[b]                                          # (C*H_in, W_in)
            # Stage 1 (MXU): contract the input column axis.
            tmp = jnp.dot(xb, wx.astype(xb.dtype),
                          preferred_element_type=jnp.float32)      # (C*H_in, T)
            # Stage 2 (VPU/XLU): contract the input row axis (wy kept in f32).
            out_b = jnp.sum(tmp.reshape(C, H_in, -1) * wy[None, :, :], axis=1)  # (C, T)

            # Direct lane-dense store of this batch's channels (no concat copy).
            o_ref[0, pl.ds(b * C, C), :] = out_b.astype(o_ref.dtype)

    return kernel


def affine_image_transformation(input_image, affine_params, img_size):
    """JAX/Pallas equivalent of AffineImageTransformation.forward.

    input_image: (N, C, H_in, W_in)
    affine_params: (N, 6) (or anything reshapable to it)
    img_size: (H_out, W_out)
    returns: (N, C, H_out, W_out)
    """
    N, C, H_in, W_in = input_image.shape
    H_out, W_out = img_size
    P_in = H_in * W_in
    P_out = H_out * W_out
    itemsize = input_image.dtype.itemsize

    # dtype-aware batch packing: keep the packed output block sublane-dense.
    sublane = {4: 8, 2: 16, 1: 32}.get(itemsize, 8)
    B = _choose_batch_pack(N, C, sublane)

    # --- generation-aware tile / VMEM budgeting -------------------------------
    cap = int(_vmem_capacity_bytes() * 0.75)        # leave compiler headroom

    in_rows = _roundup(C * H_in, sublane)
    in_cols = _roundup(W_in, 128)
    in_block_bytes = 2 * B * in_rows * in_cols * itemsize      # double-buffered input

    # per-lane-column cost of intermediates (wx, wy, tmp, stage-2 temps, out block)
    per_t = 4 * (W_in + H_in + 2 * C * H_in + 2 * C) + 2 * B * C * itemsize
    per_t = 2 * per_t                                          # slack for compiler temps

    budget = max(cap - in_block_bytes - (2 << 20), per_t * 128)
    t_cap = max(128, (budget // per_t) // 128 * 128)

    p128 = _roundup(P_out, 128)
    T = min(p128, t_cap, 8192)
    # Megacore: make sure there is >1 grid step to shard when the batch axis collapses.
    if (N // B) == 1 and T >= p128 and p128 >= 256:
        T = max(128, (p128 // 2) // 128 * 128)
    P_out_pad = _roundup(P_out, T)

    est = in_block_bytes + per_t * T + (1 << 20)
    vmem_limit = int(min(cap, max(2 * est, 16 << 20)))         # always set explicitly

    # --- inputs ---------------------------------------------------------------
    x_rows = input_image.reshape(N, C * H_in, W_in)
    theta = jnp.asarray(affine_params, jnp.float32).reshape(-1)   # (N*6,) flat SMEM

    w_coord = jnp.arange(W_in, dtype=jnp.float32).reshape(W_in, 1)
    h_coord = jnp.arange(H_in, dtype=jnp.float32).reshape(H_in, 1)

    pout = jnp.arange(P_out_pad, dtype=jnp.int32)
    w_out = (pout % W_out).astype(jnp.float32)
    h_out = (pout // W_out).astype(jnp.float32)
    xw_row = ((2.0 * w_out + 1.0) / float(W_out) - 1.0).reshape(1, P_out_pad)
    yh_row = ((2.0 * h_out + 1.0) / float(H_out) - 1.0).reshape(1, P_out_pad)

    kernel = _make_kernel(B, C, H_in, W_in)

    cost = pl.CostEstimate(
        flops=int(2 * N * C * H_in * P_out_pad * (W_in + 1)),
        transcendentals=0,
        bytes_accessed=int(N * C * (P_in + P_out_pad) * itemsize + N * 24),
    )

    out_packed = pl.pallas_call(
        kernel,
        out_shape=jax.ShapeDtypeStruct((N // B, B * C, P_out_pad), input_image.dtype),
        grid_spec=pltpu.PrefetchScalarGridSpec(
            num_scalar_prefetch=0,
            grid=(N // B, P_out_pad // T),
            in_specs=[
                # flat affine-param table lives whole in SMEM (scalar reads)
                pl.BlockSpec(memory_space=pltpu.MemorySpace.SMEM),
                pl.BlockSpec((W_in, 1), lambda nb, pt: (0, 0)),
                pl.BlockSpec((H_in, 1), lambda nb, pt: (0, 0)),
                pl.BlockSpec((1, T), lambda nb, pt: (0, pt)),
                pl.BlockSpec((1, T), lambda nb, pt: (0, pt)),
                pl.BlockSpec((B, C * H_in, W_in), lambda nb, pt: (nb, 0, 0)),
            ],
            out_specs=pl.BlockSpec((1, B * C, T), lambda nb, pt: (nb, 0, pt)),
        ),
        compiler_params=pltpu.CompilerParams(
            dimension_semantics=("parallel", "parallel"),
            vmem_limit_bytes=vmem_limit,
        ),
        cost_estimate=cost,
    )(theta, w_coord, h_coord, xw_row, yh_row, x_rows)

    out = out_packed.reshape(N, C, P_out_pad)[:, :, :P_out]
    return out.reshape(N, C, H_out, W_out)


def _reference(input_image, affine_params, img_size):
    """Pure-JAX reference of affine_grid + grid_sample (bilinear, zeros,
    align_corners=False) for correctness checking."""
    N, C, H_in, W_in = input_image.shape
    H_out, W_out = img_size
    theta = affine_params.reshape(N, 2, 3)

    xs = (2.0 * jnp.arange(W_out, dtype=jnp.float32) + 1.0) / W_out - 1.0
    ys = (2.0 * jnp.arange(H_out, dtype=jnp.float32) + 1.0) / H_out - 1.0
    yy, xx = jnp.meshgrid(ys, xs, indexing="ij")
    base = jnp.stack([xx, yy, jnp.ones_like(xx)], axis=-1)      # (H_out, W_out, 3)
    grid = jnp.einsum("hwk,njk->nhwj", base, theta)              # (N, H_out, W_out, 2)
    gx, gy = grid[..., 0], grid[..., 1]

    ix = ((gx + 1.0) * W_in - 1.0) * 0.5
    iy = ((gy + 1.0) * H_in - 1.0) * 0.5
    x0 = jnp.floor(ix); x1 = x0 + 1.0
    y0 = jnp.floor(iy); y1 = y0 + 1.0
    wx1 = ix - x0; wx0 = 1.0 - wx1
    wy1 = iy - y0; wy0 = 1.0 - wy1

    def gather(xc, yc):
        xi = jnp.clip(xc, 0, W_in - 1).astype(jnp.int32)
        yi = jnp.clip(yc, 0, H_in - 1).astype(jnp.int32)
        valid = (xc >= 0) & (xc <= W_in - 1) & (yc >= 0) & (yc <= H_in - 1)
        vals = jax.vmap(lambda img, yv, xv: img[:, yv, xv])(input_image, yi, xi)
        return vals * valid[:, None, :, :].astype(input_image.dtype)

    out = (wx0 * wy0)[:, None] * gather(x0, y0) \
        + (wx1 * wy0)[:, None] * gather(x1, y0) \
        + (wx0 * wy1)[:, None] * gather(x0, y1) \
        + (wx1 * wy1)[:, None] * gather(x1, y1)
    return out


if __name__ == "__main__":
    key = jax.random.PRNGKey(0)
    k_img, k_aff = jax.random.split(key)

    N, C, H, W = 2, 4, 16, 16
    img_size = (16, 16)

    input_image = jax.random.normal(k_img, (N, C, H, W), dtype=jnp.float32)

    # deterministic affine params: identity + small random perturbation
    identity = jnp.tile(jnp.array([1.0, 0.0, 0.0, 0.0, 1.0, 0.0], jnp.float32), (N, 1))
    affine_params = identity + 0.1 * jax.random.normal(k_aff, (N, 6), dtype=jnp.float32)

    out = affine_image_transformation(input_image, affine_params, img_size)
    out = jax.block_until_ready(out)

    ref = _reference(input_image, affine_params, img_size)
    assert out.shape == (N, C, *img_size)
    assert jnp.allclose(out, ref, atol=1e-4, rtol=1e-4), float(jnp.max(jnp.abs(out - ref)))

    print("KERNEL_OK")
</pallas_src>

<mosaic_0001>
module attributes {stable_mosaic.version = 11 : i64} {
  func.func @kernel(%arg0: i32, %arg1: i32, %arg2: memref<12xf32, #tpu.memory_space<smem>>, %arg3: memref<16x1xf32, #tpu.memory_space<vmem>>, %arg4: memref<16x1xf32, #tpu.memory_space<vmem>>, %arg5: memref<1x128xf32, #tpu.memory_space<vmem>>, %arg6: memref<1x128xf32, #tpu.memory_space<vmem>>, %arg7: memref<2x64x16xf32, #tpu.memory_space<vmem>>, %arg8: memref<1x8x128xf32, #tpu.memory_space<vmem>>) attributes {dimension_semantics = [#tpu.dimension_semantics<parallel>, #tpu.dimension_semantics<parallel>], iteration_bounds = array<i64: 1, 2>, scalar_prefetch = 0 : i64, scratch_operands = 0 : i64, tpu.core_type = #tpu.core_type<tc>, window_params = [{transform_indices = @transform_0, window_bounds = array<i64: 12>}, {pipeline_mode = #tpu.pipeline_mode<synchronous>, transform_indices = @transform_1, window_bounds = array<i64: 16, 1>}, {pipeline_mode = #tpu.pipeline_mode<synchronous>, transform_indices = @transform_2, window_bounds = array<i64: 16, 1>}, {transform_indices = @transform_3, window_bounds = array<i64: 1, 128>}, {transform_indices = @transform_4, window_bounds = array<i64: 1, 128>}, {transform_indices = @transform_5, window_bounds = array<i64: 2, 64, 16>}, {transform_indices = @transform_6, window_bounds = array<i64: 1, 8, 128>}]} {
    %c0 = arith.constant 0 : index
    %c0_0 = arith.constant 0 : index
    %0 = vector.load %arg3[%c0, %c0_0] : memref<16x1xf32, #tpu.memory_space<vmem>>, vector<16x1xf32>
    %c0_1 = arith.constant 0 : index
    %c0_2 = arith.constant 0 : index
    %1 = vector.load %arg4[%c0_1, %c0_2] : memref<16x1xf32, #tpu.memory_space<vmem>>, vector<16x1xf32>
    %c0_3 = arith.constant 0 : index
    %c0_4 = arith.constant 0 : index
    %2 = vector.load %arg5[%c0_3, %c0_4] : memref<1x128xf32, #tpu.memory_space<vmem>>, vector<1x128xf32>
    %c0_5 = arith.constant 0 : index
    %c0_6 = arith.constant 0 : index
    %3 = vector.load %arg6[%c0_5, %c0_6] : memref<1x128xf32, #tpu.memory_space<vmem>>, vector<1x128xf32>
    %c2_i32 = arith.constant 2 : i32
    %4 = arith.muli %arg0, %c2_i32 : i32
    %c0_i32 = arith.constant 0 : i32
    %5 = arith.addi %4, %c0_i32 : i32
    %c6_i32 = arith.constant 6 : i32
    %6 = arith.muli %5, %c6_i32 : i32
    %c0_i32_7 = arith.constant 0 : i32
    %7 = arith.addi %6, %c0_i32_7 : i32
    %8 = arith.index_cast %7 : i32 to index
    %9 = memref.load %arg2[%8] : memref<12xf32, #tpu.memory_space<smem>>
    %c1_i32 = arith.constant 1 : i32
    %10 = arith.addi %6, %c1_i32 : i32
    %11 = arith.index_cast %10 : i32 to index
    %12 = memref.load %arg2[%11] : memref<12xf32, #tpu.memory_space<smem>>
    %c2_i32_8 = arith.constant 2 : i32
    %13 = arith.addi %6, %c2_i32_8 : i32
    %14 = arith.index_cast %13 : i32 to index
    %15 = memref.load %arg2[%14] : memref<12xf32, #tpu.memory_space<smem>>
    %c3_i32 = arith.constant 3 : i32
    %16 = arith.addi %6, %c3_i32 : i32
    %17 = arith.index_cast %16 : i32 to index
    %18 = memref.load %arg2[%17] : memref<12xf32, #tpu.memory_space<smem>>
    %c4_i32 = arith.constant 4 : i32
    %19 = arith.addi %6, %c4_i32 : i32
    %20 = arith.index_cast %19 : i32 to index
    %21 = memref.load %arg2[%20] : memref<12xf32, #tpu.memory_space<smem>>
    %c5_i32 = arith.constant 5 : i32
    %22 = arith.addi %6, %c5_i32 : i32
    %23 = arith.index_cast %22 : i32 to index
    %24 = memref.load %arg2[%23] : memref<12xf32, #tpu.memory_space<smem>>
    %cst = arith.constant 8.000000e+00 : f32
    %25 = arith.mulf %cst, %9 : f32
    %cst_9 = arith.constant 8.000000e+00 : f32
    %26 = arith.mulf %cst_9, %12 : f32
    %cst_10 = arith.constant 8.000000e+00 : f32
    %27 = arith.mulf %cst_10, %15 : f32
    %cst_11 = arith.constant 7.500000e+00 : f32
    %28 = arith.addf %27, %cst_11 : f32
    %cst_12 = arith.constant 8.000000e+00 : f32
    %29 = arith.mulf %cst_12, %18 : f32
    %cst_13 = arith.constant 8.000000e+00 : f32
    %30 = arith.mulf %cst_13, %21 : f32
    %cst_14 = arith.constant 8.000000e+00 : f32
    %31 = arith.mulf %cst_14, %24 : f32
    %cst_15 = arith.constant 7.500000e+00 : f32
    %32 = arith.addf %31, %cst_15 : f32
    %33 = vector.broadcast %25 : f32 to vector<1x128xf32>
    %34 = arith.mulf %33, %2 : vector<1x128xf32>
    %35 = vector.broadcast %26 : f32 to vector<1x128xf32>
    %36 = arith.mulf %35, %3 : vector<1x128xf32>
    %37 = arith.addf %34, %36 : vector<1x128xf32>
    %38 = vector.broadcast %28 : f32 to vector<1x128xf32>
    %39 = arith.addf %37, %38 : vector<1x128xf32>
    %40 = vector.broadcast %29 : f32 to vector<1x128xf32>
    %41 = arith.mulf %40, %2 : vector<1x128xf32>
    %42 = vector.broadcast %30 : f32 to vector<1x128xf32>
    %43 = arith.mulf %42, %3 : vector<1x128xf32>
    %44 = arith.addf %41, %43 : vector<1x128xf32>
    %45 = vector.broadcast %32 : f32 to vector<1x128xf32>
    %46 = arith.addf %44, %45 : vector<1x128xf32>
    %47 = vector.broadcast %39 : vector<1x128xf32> to vector<16x128xf32>
    %48 = vector.broadcast %0 : vector<16x1xf32> to vector<16x128xf32>
    %49 = arith.subf %47, %48 : vector<16x128xf32>
    %50 = math.absf %49 : vector<16x128xf32>
    %cst_16 = arith.constant 1.000000e+00 : f32
    %51 = vector.broadcast %cst_16 : f32 to vector<16x128xf32>
    %52 = arith.subf %51, %50 : vector<16x128xf32>
    %cst_17 = arith.constant 0.000000e+00 : f32
    %53 = vector.broadcast %cst_17 : f32 to vector<16x128xf32>
    %54 = arith.maximumf %52, %53 : vector<16x128xf32>
    %55 = vector.broadcast %46 : vector<1x128xf32> to vector<16x128xf32>
    %56 = vector.broadcast %1 : vector<16x1xf32> to vector<16x128xf32>
    %57 = arith.subf %55, %56 : vector<16x128xf32>
    %58 = math.absf %57 : vector<16x128xf32>
    %cst_18 = arith.constant 1.000000e+00 : f32
    %59 = vector.broadcast %cst_18 : f32 to vector<16x128xf32>
    %60 = arith.subf %59, %58 : vector<16x128xf32>
    %cst_19 = arith.constant 0.000000e+00 : f32
    %61 = vector.broadcast %cst_19 : f32 to vector<16x128xf32>
    %62 = arith.maximumf %60, %61 : vector<16x128xf32>
    %c0_20 = arith.constant 0 : index
    %c0_21 = arith.constant 0 : index
    %c0_22 = arith.constant 0 : index
    %63 = vector.load %arg7[%c0_20, %c0_21, %c0_22] : memref<2x64x16xf32, #tpu.memory_space<vmem>>, vector<1x64x16xf32>
    %64 = vector.shape_cast %63 : vector<1x64x16xf32> to vector<64x16xf32>
    %cst_23 = arith.constant dense<0.000000e+00> : vector<64x128xf32>
    %65 = tpu.matmul %64, %54, %cst_23 {dimension_numbers = #tpu.dot_dimension_numbers<[1], [0], [0], [1], [0, 0, 1, 1], [], []>} : vector<64x16xf32>, vector<16x128xf32>, vector<64x128xf32> -> vector<64x128xf32>
    %66 = vector.shape_cast %65 : vector<64x128xf32> to vector<4x16x128xf32>
    %67 = vector.shape_cast %62 : vector<16x128xf32> to vector<1x16x128xf32>
    %68 = vector.broadcast %67 : vector<1x16x128xf32> to vector<4x16x128xf32>
    %69 = arith.mulf %66, %68 : vector<4x16x128xf32>
    %cst_24 = arith.constant dense<0.000000e+00> : vector<4x128xf32>
    %70 = vector.multi_reduction <add>, %69, %cst_24 [1] : vector<4x16x128xf32> to vector<4x128xf32>
    %c0_25 = arith.constant 0 : index
    %c0_26 = arith.constant 0 : index
    %c0_27 = arith.constant 0 : index
    %71 = vector.load %arg8[%c0_25, %c0_26, %c0_27] : memref<1x8x128xf32, #tpu.memory_space<vmem>>, vector<1x4x128xf32>
    %72 = vector.shape_cast %71 : vector<1x4x128xf32> to vector<4x128xf32>
    %73 = vector.shape_cast %70 : vector<4x128xf32> to vector<1x4x128xf32>
    tpu.vector_store %arg8[%c0_25, %c0_26, %c0_27], %73 {strides = array<i32>} : memref<1x8x128xf32, #tpu.memory_space<vmem>>, vector<1x4x128xf32>,
    %c2_i32_28 = arith.constant 2 : i32
    %74 = arith.muli %arg0, %c2_i32_28 : i32
    %c1_i32_29 = arith.constant 1 : i32
    %75 = arith.addi %74, %c1_i32_29 : i32
    %c6_i32_30 = arith.constant 6 : i32
    %76 = arith.muli %75, %c6_i32_30 : i32
    %c0_i32_31 = arith.constant 0 : i32
    %77 = arith.addi %76, %c0_i32_31 : i32
    %78 = arith.index_cast %77 : i32 to index
    %79 = memref.load %arg2[%78] : memref<12xf32, #tpu.memory_space<smem>>
    %c1_i32_32 = arith.constant 1 : i32
    %80 = arith.addi %76, %c1_i32_32 : i32
    %81 = arith.index_cast %80 : i32 to index
    %82 = memref.load %arg2[%81] : memref<12xf32, #tpu.memory_space<smem>>
    %c2_i32_33 = arith.constant 2 : i32
    %83 = arith.addi %76, %c2_i32_33 : i32
    %84 = arith.index_cast %83 : i32 to index
    %85 = memref.load %arg2[%84] : memref<12xf32, #tpu.memory_space<smem>>
    %c3_i32_34 = arith.constant 3 : i32
    %86 = arith.addi %76, %c3_i32_34 : i32
    %87 = arith.index_cast %86 : i32 to index
    %88 = memref.load %arg2[%87] : memref<12xf32, #tpu.memory_space<smem>>
    %c4_i32_35 = arith.constant 4 : i32
    %89 = arith.addi %76, %c4_i32_35 : i32
    %90 = arith.index_cast %89 : i32 to index
    %91 = memref.load %arg2[%90] : memref<12xf32, #tpu.memory_space<smem>>
    %c5_i32_36 = arith.constant 5 : i32
    %92 = arith.addi %76, %c5_i32_36 : i32
    %93 = arith.index_cast %92 : i32 to index
    %94 = memref.load %arg2[%93] : memref<12xf32, #tpu.memory_space<smem>>
    %cst_37 = arith.constant 8.000000e+00 : f32
    %95 = arith.mulf %cst_37, %79 : f32
    %cst_38 = arith.constant 8.000000e+00 : f32
    %96 = arith.mulf %cst_38, %82 : f32
    %cst_39 = arith.constant 8.000000e+00 : f32
    %97 = arith.mulf %cst_39, %85 : f32
    %cst_40 = arith.constant 7.500000e+00 : f32
    %98 = arith.addf %97, %cst_40 : f32
    %cst_41 = arith.constant 8.000000e+00 : f32
    %99 = arith.mulf %cst_41, %88 : f32
    %cst_42 = arith.constant 8.000000e+00 : f32
    %100 = arith.mulf %cst_42, %91 : f32
    %cst_43 = arith.constant 8.000000e+00 : f32
    %101 = arith.mulf %cst_43, %94 : f32
    %cst_44 = arith.constant 7.500000e+00 : f32
    %102 = arith.addf %101, %cst_44 : f32
    %103 = vector.broadcast %95 : f32 to vector<1x128xf32>
    %104 = arith.mulf %103, %2 : vector<1x128xf32>
    %105 = vector.broadcast %96 : f32 to vector<1x128xf32>
    %106 = arith.mulf %105, %3 : vector<1x128xf32>
    %107 = arith.addf %104, %106 : vector<1x128xf32>
    %108 = vector.broadcast %98 : f32 to vector<1x128xf32>
    %109 = arith.addf %107, %108 : vector<1x128xf32>
    %110 = vector.broadcast %99 : f32 to vector<1x128xf32>
    %111 = arith.mulf %110, %2 : vector<1x128xf32>
    %112 = vector.broadcast %100 : f32 to vector<1x128xf32>
    %113 = arith.mulf %112, %3 : vector<1x128xf32>
    %114 = arith.addf %111, %113 : vector<1x128xf32>
    %115 = vector.broadcast %102 : f32 to vector<1x128xf32>
    %116 = arith.addf %114, %115 : vector<1x128xf32>
    %117 = vector.broadcast %109 : vector<1x128xf32> to vector<16x128xf32>
    %118 = vector.broadcast %0 : vector<16x1xf32> to vector<16x128xf32>
    %119 = arith.subf %117, %118 : vector<16x128xf32>
    %120 = math.absf %119 : vector<16x128xf32>
    %cst_45 = arith.constant 1.000000e+00 : f32
    %121 = vector.broadcast %cst_45 : f32 to vector<16x128xf32>
    %122 = arith.subf %121, %120 : vector<16x128xf32>
    %cst_46 = arith.constant 0.000000e+00 : f32
    %123 = vector.broadcast %cst_46 : f32 to vector<16x128xf32>
    %124 = arith.maximumf %122, %123 : vector<16x128xf32>
    %125 = vector.broadcast %116 : vector<1x128xf32> to vector<16x128xf32>
    %126 = vector.broadcast %1 : vector<16x1xf32> to vector<16x128xf32>
    %127 = arith.subf %125, %126 : vector<16x128xf32>
    %128 = math.absf %127 : vector<16x128xf32>
    %cst_47 = arith.constant 1.000000e+00 : f32
    %129 = vector.broadcast %cst_47 : f32 to vector<16x128xf32>
    %130 = arith.subf %129, %128 : vector<16x128xf32>
    %cst_48 = arith.constant 0.000000e+00 : f32
    %131 = vector.broadcast %cst_48 : f32 to vector<16x128xf32>
    %132 = arith.maximumf %130, %131 : vector<16x128xf32>
    %c1 = arith.constant 1 : index
    %c0_49 = arith.constant 0 : index
    %c0_50 = arith.constant 0 : index
    %133 = vector.load %arg7[%c1, %c0_49, %c0_50] : memref<2x64x16xf32, #tpu.memory_space<vmem>>, vector<1x64x16xf32>
    %134 = vector.shape_cast %133 : vector<1x64x16xf32> to vector<64x16xf32>
    %cst_51 = arith.constant dense<0.000000e+00> : vector<64x128xf32>
    %135 = tpu.matmul %134, %124, %cst_51 {dimension_numbers = #tpu.dot_dimension_numbers<[1], [0], [0], [1], [0, 0, 1, 1], [], []>} : vector<64x16xf32>, vector<16x128xf32>, vector<64x128xf32> -> vector<64x128xf32>
    %136 = vector.shape_cast %135 : vector<64x128xf32> to vector<4x16x128xf32>
    %137 = vector.shape_cast %132 : vector<16x128xf32> to vector<1x16x128xf32>
    %138 = vector.broadcast %137 : vector<1x16x128xf32> to vector<4x16x128xf32>
    %139 = arith.mulf %136, %138 : vector<4x16x128xf32>
    %cst_52 = arith.constant dense<0.000000e+00> : vector<4x128xf32>
    %140 = vector.multi_reduction <add>, %139, %cst_52 [1] : vector<4x16x128xf32> to vector<4x128xf32>
    %c0_53 = arith.constant 0 : index
    %c4 = arith.constant 4 : index
    %c0_54 = arith.constant 0 : index
    %141 = vector.load %arg8[%c0_53, %c4, %c0_54] : memref<1x8x128xf32, #tpu.memory_space<vmem>>, vector<1x4x128xf32>
    %142 = vector.shape_cast %141 : vector<1x4x128xf32> to vector<4x128xf32>
    %143 = vector.shape_cast %140 : vector<4x128xf32> to vector<1x4x128xf32>
    tpu.vector_store %arg8[%c0_53, %c4, %c0_54], %143 {strides = array<i32>} : memref<1x8x128xf32, #tpu.memory_space<vmem>>, vector<1x4x128xf32>,
    return
  }
  func.func @transform_0(%arg0: i32, %arg1: i32) -> i32 {
    %c0_i32 = arith.constant 0 : i32
    %c0_i32_0 = arith.constant 0 : i32
    return %c0_i32 : i32
  }
  func.func @transform_1(%arg0: i32, %arg1: i32) -> (i32, i32) {
    %c0_i32 = arith.constant 0 : i32
    %c0_i32_0 = arith.constant 0 : i32
    %c0_i32_1 = arith.constant 0 : i32
    return %c0_i32, %c0_i32_0 : i32, i32
  }
  func.func @transform_2(%arg0: i32, %arg1: i32) -> (i32, i32) {
    %c0_i32 = arith.constant 0 : i32
    %c0_i32_0 = arith.constant 0 : i32
    %c0_i32_1 = arith.constant 0 : i32
    return %c0_i32, %c0_i32_0 : i32, i32
  }
  func.func @transform_3(%arg0: i32, %arg1: i32) -> (i32, i32) {
    %c0_i32 = arith.constant 0 : i32
    %c0_i32_0 = arith.constant 0 : i32
    return %c0_i32, %arg1 : i32, i32
  }
  func.func @transform_4(%arg0: i32, %arg1: i32) -> (i32, i32) {
    %c0_i32 = arith.constant 0 : i32
    %c0_i32_0 = arith.constant 0 : i32
    return %c0_i32, %arg1 : i32, i32
  }
  func.func @transform_5(%arg0: i32, %arg1: i32) -> (i32, i32, i32) {
    %c0_i32 = arith.constant 0 : i32
    %c0_i32_0 = arith.constant 0 : i32
    %c0_i32_1 = arith.constant 0 : i32
    return %arg0, %c0_i32, %c0_i32_0 : i32, i32, i32
  }
  func.func @transform_6(%arg0: i32, %arg1: i32) -> (i32, i32, i32) {
    %c0_i32 = arith.constant 0 : i32
    %c0_i32_0 = arith.constant 0 : i32
    return %arg0, %c0_i32, %arg1 : i32, i32, i32
  }
}

</mosaic_0001>

<llo_original>
// kernel: tpu_custom_call.1
$region0: #{tpu_custom_call.1}
  #allocation0 [shape = 'u32[]', space=smem, size = 0x4, offset = 0x4, fixed_abs, tag = 'smem constant byte address 0x4 - core index']
  #allocation1 [shape = 'u32[144,128]{1,0:T(1,128)}', space=vmem, size = 0x12000, scoped, tag = 'internal scratch']
  %s0 = inlined_call_operand.vmem [shape: f32[12], index: 0, kind: input, shape index: {}]
  %s1 = inlined_call_operand.vmem [shape: f32[16,1], index: 1, kind: input, shape index: {}]
  %s2 = inlined_call_operand.vmem [shape: f32[16,1], index: 2, kind: input, shape index: {}]
  %s3 = inlined_call_operand.vmem [shape: f32[1,256], index: 3, kind: input, shape index: {}]
  %s4 = inlined_call_operand.vmem [shape: f32[1,256], index: 4, kind: input, shape index: {}]
  %s5 = inlined_call_operand.vmem [shape: f32[2,64,16], index: 5, kind: input, shape index: {}]
  %s6 = inlined_call_operand.hbm [shape: f32[1,8,256], index: 6, kind: output, shape index: {}]
  %s7 = sld [smem:[#allocation0]]
  $region61: #{tpu_custom_call.1} parent=0
    _
  %s9 = ssub.s32 1, %s7
  %s10 = scalar_select 0, %s9, %s7
  $region1: #{tpu_custom_call.1} parent=0
    #allocation2 [shape = 'u8[512]{0}', space=smem, size = 0x200, scoped, tag = 'input window, operand 0, single buffered']
    #allocation3 [shape = 's32[2]{0}', space=sflag, size = 0x8, scoped, tag = 'scoped memory for tpu_custom_call.1']
    #allocation4 [shape = 's32[2]{0}', space=sflag, size = 0x8, scoped, tag = 'scoped memory for tpu_custom_call.1']
    #allocation5 [shape = 'u8[8192]{0}', space=vmem, size = 0x2000, scoped, tag = 'output window, operand 0']
    %11 = vsyncpa [#allocation4], 0
    %12 = vsyncpa [#allocation3], 0
    %s13 = scalar_lea.sflag [#allocation3], 1
    %14 = vsyncpa %s13, 0
    loop: start=0, step=1, limit=4
    $region2: #{tpu_custom_call.1} parent=1 // loop_pre_header
      _
    $region3: #{tpu_custom_call.1} parent=1 // loop_header
      %s16 = sphi 0, %s20
      %p17 = scmp.ge.s32.totalorder %s16, 4
      %s23 = sphi 0, %s35
      %s24 = sphi 0, %s31
      %s25 = sphi 0, %s23
      %s26 = sphi 0, %s24
      %s27 = sphi 0, %s25
      %s28 = sphi 0, %s26
      %s36 = sphi 0, %s36
      %s38 = sphi 0, %s36
      %s39 = sphi 0, %s38
      %s53 = sphi 0, %s39
      %s57 = sphi 0, %s57
      %s59 = sphi 0, %s57
      %s60 = sphi 0, %s59
      %s74 = sphi 0, %s60
      %s78 = sphi 0, %s78
      %s80 = sphi 0, %s78
      %s81 = sphi 0, %s80
      %s95 = sphi 0, %s81
      %s101 = sphi 0, %s103
      %s104 = sphi 0, %s101
      %s105 = sphi 0, %s104
      %s121 = sphi 0, %s105
      %s127 = sphi 0, %s129
      %s130 = sphi 0, %s127
      %s131 = sphi 0, %s130
      %s147 = sphi 0, %s131
      %s153 = sphi 0, %s155
      %s156 = sphi 0, %s153
      %s157 = sphi 0, %s156
      %s173 = sphi 0, %s157
      %s181 = sphi 0, %s183
      %s184 = sphi 0, %s181
      %s185 = sphi 0, %s184
      %s201 = sphi 0, %s185
    $region4: #{tpu_custom_call.1} parent=1 // loop_header_branch
      %19 = sbr.rel (%p17) target = $region8
    $region5: #{tpu_custom_call.1} parent=1 // loop_body
      %s21 = ssub.s32 %s16, 1
      %s22 = ssub.s32 %s16, 2
      %s29 = sadd.s32 1, %s24
      %p30 = scmp.ge.s32.totalorder %s29, 2
      %s31 = scalar_select %p30, 0, %s29
      %s32 = sadd.s32 1, %s23
      %s33 = scalar_select %p30, %s32, %s23
      %p34 = scmp.ge.s32.totalorder %s33, 1
      %s35 = scalar_select %p34, 0, %s33
      %s37 = sadd.s32 %s36, 1
      %p40 = scmp.eq.s32.totalorder %s16, 1
      %p41 = scmp.ne.s32.totalorder %s36, %s38
      %p42 = scmp.eq.s32.totalorder %s16, 0
      %p43 = por %p41, %p42
      %p44 = scmp.ne.s32.totalorder %s36, %s38
      %p45 = scmp.eq.s32.totalorder %s21, 1
      %p46 = por %p44, %p45
      %p47 = scmp.ne.s32.totalorder %s38, %s39
      %p48 = scmp.eq.s32.totalorder %s21, 0
      %p49 = por %p47, %p48
      %p50 = scmp.ne.s32.totalorder %s38, %s39
      %p51 = scmp.eq.s32.totalorder %s22, 1
      %p52 = por %p50, %p51
      %p54 = scmp.ne.s32.totalorder %s39, %s53
      %p55 = scmp.eq.s32.totalorder %s22, 0
      %p56 = por %p54, %p55
      %s58 = sadd.s32 %s57, 1
      %p61 = scmp.eq.s32.totalorder %s16, 1
      %p62 = scmp.ne.s32.totalorder %s57, %s59
      %p63 = scmp.eq.s32.totalorder %s16, 0
      %p64 = por %p62, %p63
      %p65 = scmp.ne.s32.totalorder %s57, %s59
      %p66 = scmp.eq.s32.totalorder %s21, 1
      %p67 = por %p65, %p66
      %p68 = scmp.ne.s32.totalorder %s59, %s60
      %p69 = scmp.eq.s32.totalorder %s21, 0
      %p70 = por %p68, %p69
      %p71 = scmp.ne.s32.totalorder %s59, %s60
      %p72 = scmp.eq.s32.totalorder %s22, 1
      %p73 = por %p71, %p72
      %p75 = scmp.ne.s32.totalorder %s60, %s74
      %p76 = scmp.eq.s32.totalorder %s22, 0
      %p77 = por %p75, %p76
      %s79 = sadd.s32 %s78, 1
      %p82 = scmp.eq.s32.totalorder %s16, 1
      %p83 = scmp.ne.s32.totalorder %s78, %s80
      %p84 = scmp.eq.s32.totalorder %s16, 0
      %p85 = por %p83, %p84
      %p86 = scmp.ne.s32.totalorder %s78, %s80
      %p87 = scmp.eq.s32.totalorder %s21, 1
      %p88 = por %p86, %p87
      %p89 = scmp.ne.s32.totalorder %s80, %s81
      %p90 = scmp.eq.s32.totalorder %s21, 0
      %p91 = por %p89, %p90
      %p92 = scmp.ne.s32.totalorder %s80, %s81
      %p93 = scmp.eq.s32.totalorder %s22, 1
      %p94 = por %p92, %p93
      %p96 = scmp.ne.s32.totalorder %s81, %s95
      %p97 = scmp.eq.s32.totalorder %s22, 0
      %p98 = por %p96, %p97
      %s99 = ssub.s32 %s24, %s31
      %p100 = scmp.eq.s32.totalorder %s99, 0
      %s102 = sadd.s32 %s101, 1
      %s103 = scalar_select %p100, %s101, %s102
      %p106 = pneg %p100
      %p107 = scmp.eq.s32.totalorder %s16, 1
      %p108 = por %p106, %p107
      %p109 = scmp.ne.s32.totalorder %s101, %s104
      %p110 = scmp.eq.s32.totalorder %s16, 0
      %p111 = por %p109, %p110
      %p112 = scmp.ne.s32.totalorder %s101, %s104
      %p113 = scmp.eq.s32.totalorder %s21, 1
      %p114 = por %p112, %p113
      %p115 = scmp.ne.s32.totalorder %s104, %s105
      %p116 = scmp.eq.s32.totalorder %s21, 0
      %p117 = por %p115, %p116
      %p118 = scmp.ne.s32.totalorder %s104, %s105
      %p119 = scmp.eq.s32.totalorder %s22, 1
      %p120 = por %p118, %p119
      %p122 = scmp.ne.s32.totalorder %s105, %s121
      %p123 = scmp.eq.s32.totalorder %s22, 0
      %p124 = por %p122, %p123
      %s125 = ssub.s32 %s24, %s31
      %p126 = scmp.eq.s32.totalorder %s125, 0
      %s128 = sadd.s32 %s127, 1
      %s129 = scalar_select %p126, %s127, %s128
      %p132 = pneg %p126
      %p133 = scmp.eq.s32.totalorder %s16, 1
      %p134 = por %p132, %p133
      %p135 = scmp.ne.s32.totalorder %s127, %s130
      %p136 = scmp.eq.s32.totalorder %s16, 0
      %p137 = por %p135, %p136
      %p138 = scmp.ne.s32.totalorder %s127, %s130
      %p139 = scmp.eq.s32.totalorder %s21, 1
      %p140 = por %p138, %p139
      %p141 = scmp.ne.s32.totalorder %s130, %s131
      %p142 = scmp.eq.s32.totalorder %s21, 0
      %p143 = por %p141, %p142
      %p144 = scmp.ne.s32.totalorder %s130, %s131
      %p145 = scmp.eq.s32.totalorder %s22, 1
      %p146 = por %p144, %p145
      %p148 = scmp.ne.s32.totalorder %s131, %s147
      %p149 = scmp.eq.s32.totalorder %s22, 0
      %p150 = por %p148, %p149
      %s151 = ssub.s32 %s23, %s35
      %p152 = scmp.eq.s32.totalorder %s151, 0
      %s154 = sadd.s32 %s153, 1
      %s155 = scalar_select %p152, %s153, %s154
      %p158 = pneg %p152
      %p159 = scmp.eq.s32.totalorder %s16, 1
      %p160 = por %p158, %p159
      %p161 = scmp.ne.s32.totalorder %s153, %s156
      %p162 = scmp.eq.s32.totalorder %s16, 0
      %p163 = por %p161, %p162
      %p164 = scmp.ne.s32.totalorder %s153, %s156
      %p165 = scmp.eq.s32.totalorder %s21, 1
      %p166 = por %p164, %p165
      %p167 = scmp.ne.s32.totalorder %s156, %s157
      %p168 = scmp.eq.s32.totalorder %s21, 0
      %p169 = por %p167, %p168
      %p170 = scmp.ne.s32.totalorder %s156, %s157
      %p171 = scmp.eq.s32.totalorder %s22, 1
      %p172 = por %p170, %p171
      %p174 = scmp.ne.s32.totalorder %s157, %s173
      %p175 = scmp.eq.s32.totalorder %s22, 0
      %p176 = por %p174, %p175
      %s177 = ssub.s32 %s23, %s35
      %s178 = ssub.s32 %s24, %s31
      %s179 = sor.u32 %s177, %s178
      %p180 = scmp.eq.s32.totalorder %s179, 0
      %s182 = sadd.s32 %s181, 1
      %s183 = scalar_select %p180, %s181, %s182
      %p186 = pneg %p180
      %p187 = scmp.eq.s32.totalorder %s16, 1
      %p188 = por %p186, %p187
      %p189 = scmp.ne.s32.totalorder %s181, %s184
      %p190 = scmp.eq.s32.totalorder %s16, 0
      %p191 = por %p189, %p190
      %p192 = scmp.ne.s32.totalorder %s181, %s184
      %p193 = scmp.eq.s32.totalorder %s21, 1
      %p194 = por %p192, %p193
      %p195 = scmp.ne.s32.totalorder %s184, %s185
      %p196 = scmp.eq.s32.totalorder %s21, 0
      %p197 = por %p195, %p196
      %p198 = scmp.ne.s32.totalorder %s184, %s185
      %p199 = scmp.eq.s32.totalorder %s22, 1
      %p200 = por %p198, %p199
      %p202 = scmp.ne.s32.totalorder %s185, %s201
      %p203 = scmp.eq.s32.totalorder %s22, 0
      %p204 = por %p202, %p203
      %p205 = scmp.le.s32.totalorder 1, %s16
      %p206 = scmp.lt.s32.totalorder %s16, 3
      %p207 = pnand %p205, %p206
      %p208 = pneg %p207
      // Predicated region
      $region9: #{tpu_custom_call.1} parent=5 // pred_check
        _
      $region10: #{tpu_custom_call.1} parent=5 // pred_check_branch
        %210 = sbr.rel (%p207) target = $region12
      $region11: #{tpu_custom_call.1} parent=5 // pred_region
        %s211 = ssub.s32 %s16, 1
        // Predicated region
        $region13: #{tpu_custom_call.1} parent=11 // pred_check
          %p212 = pneg %p49
        $region14: #{tpu_custom_call.1} parent=11 // pred_check_branch
          %214 = sbr.rel (%p212) target = $region16
        $region15: #{tpu_custom_call.1} parent=11 // pred_region
          %s216 = ssub.s32 16, 16
          %217 = vsyncadd [#allocation4], %s216
          %s219 = sshll.u32 %s0, 4
          %s220 = int_to_ptr.vmem [resolvable:$true] %s219
          %222 = dma.vmem_to_smem %s220, 16, [#allocation2], [#allocation4]
        $region16: #{tpu_custom_call.1} parent=11 // pred_fallthru
          _
        // Predicated region
        $region17: #{tpu_custom_call.1} parent=11 // pred_check
          %p223 = pneg %p70
        $region18: #{tpu_custom_call.1} parent=11 // pred_check_branch
          %225 = sbr.rel (%p223) target = $region20
        $region19: #{tpu_custom_call.1} parent=11 // pred_region
          _
        $region20: #{tpu_custom_call.1} parent=11 // pred_fallthru
          _
        // Predicated region
        $region21: #{tpu_custom_call.1} parent=11 // pred_check
          %p226 = pneg %p91
        $region22: #{tpu_custom_call.1} parent=11 // pred_check_branch
          %228 = sbr.rel (%p226) target = $region24
        $region23: #{tpu_custom_call.1} parent=11 // pred_region
          _
        $region24: #{tpu_custom_call.1} parent=11 // pred_fallthru
          _
        // Predicated region
        $region25: #{tpu_custom_call.1} parent=11 // pred_check
          %p229 = pneg %p169
        $region26: #{tpu_custom_call.1} parent=11 // pred_check_branch
          %231 = sbr.rel (%p229) target = $region28
        $region27: #{tpu_custom_call.1} parent=11 // pred_region
          %s232 = smul.u32 2, %s25
          %p233 = scmp.lt.s32.totalorder %s232, 1
          %s234 = scalar_select %p233, %s232, 1
          %s235 = smul.addr %s234, 8
          %s236 = smul.addr %s235, 8
          %s237 = scalar_lea.vmem %s5, %s236
          %s238 = smul.u32 2, %s25
        $region28: #{tpu_custom_call.1} parent=11 // pred_fallthru
          _
      $region12: #{tpu_custom_call.1} parent=5 // pred_fallthru
        _
      %p239 = scmp.lt.s32.totalorder %s16, 2
      // Predicated region
      $region29: #{tpu_custom_call.1} parent=5 // pred_check
        %p240 = pneg %p239
      $region30: #{tpu_custom_call.1} parent=5 // pred_check_branch
        %242 = sbr.rel (%p240) target = $region32
      $region31: #{tpu_custom_call.1} parent=5 // pred_region
        // Predicated region
        $region33: #{tpu_custom_call.1} parent=31 // pred_check
          %p243 = pneg %p111
        $region34: #{tpu_custom_call.1} parent=31 // pred_check_branch
          %245 = sbr.rel (%p243) target = $region36
        $region35: #{tpu_custom_call.1} parent=31 // pred_region
          %p246 = scmp.lt.s32.totalorder %s24, 1
          %s247 = scalar_select %p246, %s24, 1
          %s248 = scalar_lea.vmem %s3, %s247
        $region36: #{tpu_custom_call.1} parent=31 // pred_fallthru
          _
        // Predicated region
        $region37: #{tpu_custom_call.1} parent=31 // pred_check
          %p249 = pneg %p137
        $region38: #{tpu_custom_call.1} parent=31 // pred_check_branch
          %251 = sbr.rel (%p249) target = $region40
        $region39: #{tpu_custom_call.1} parent=31 // pred_region
          %p252 = scmp.lt.s32.totalorder %s24, 1
          %s253 = scalar_select %p252, %s24, 1
          %s254 = scalar_lea.vmem %s4, %s253
        $region40: #{tpu_custom_call.1} parent=31 // pred_fallthru
          _
      $region32: #{tpu_custom_call.1} parent=5 // pred_fallthru
        _
      %p255 = scmp.le.s32.totalorder 1, %s16
      %p256 = scmp.lt.s32.totalorder %s16, 3
      %p257 = pnand %p255, %p256
      %p258 = pneg %p257
      // Predicated region
      $region41: #{tpu_custom_call.1} parent=5 // pred_check
        _
      $region42: #{tpu_custom_call.1} parent=5 // pred_check_branch
        %260 = sbr.rel (%p257) target = $region44
      $region43: #{tpu_custom_call.1} parent=5 // pred_region
        %s261 = ssub.s32 %s16, 1
        // Predicated region
        $region45: #{tpu_custom_call.1} parent=43 // pred_check
          %p262 = pneg %p49
        $region46: #{tpu_custom_call.1} parent=43 // pred_check_branch
          %264 = sbr.rel (%p262) target = $region48
        $region47: #{tpu_custom_call.1} parent=43 // pred_region
          %265 = dma.done [#allocation4], 16
        $region48: #{tpu_custom_call.1} parent=43 // pred_fallthru
          _
        %266 = sfence
        %p267 = pneg %p49
        %p268 = pneg %p46
        %p269 = pneg %p70
        %p270 = pneg %p67
        %p271 = pneg %p91
        %p272 = pneg %p88
        %p273 = scmp.lt.s32.totalorder %s26, 1
        %s274 = scalar_select %p273, %s26, 1
        %s275 = scalar_lea.vmem %s3, %s274
        %p276 = pneg %p117
        %p277 = pneg %p114
        %p278 = scmp.lt.s32.totalorder %s26, 1
        %s279 = scalar_select %p278, %s26, 1
        %s280 = scalar_lea.vmem %s4, %s279
        %p281 = pneg %p143
        %p282 = pneg %p140
        %s283 = smul.u32 2, %s25
        %p284 = scmp.lt.s32.totalorder %s283, 1
        %s285 = scalar_select %p284, %s283, 1
        %s286 = smul.addr %s285, 8
        %s287 = smul.addr %s286, 8
        %s288 = scalar_lea.vmem %s5, %s287
        %p289 = pneg %p169
        %p290 = pneg %p166
        %p291 = pneg %p197
        %p292 = pneg %p194
        %s293 = sand.u32 %s184, 1
        %s294 = scalar_lea.sflag [#allocation3], %s293
        %s295 = sand.u32 %s184, 1
        %s296 = smul.addr %s295, 8
        %s297 = scalar_lea.vmem [#allocation5], %s296
        %p298 = scmp.lt.s32.totalorder %s26, 1
        %s299 = scalar_select %p298, %s26, 1
        %s300 = scalar_lea.vmem %s3, %s299
        %p301 = scmp.lt.s32.totalorder %s26, 1
        %s302 = scalar_select %p301, %s26, 1
        %s303 = scalar_lea.vmem %s4, %s302
        %s304 = smul.u32 2, %s25
        %p305 = scmp.lt.s32.totalorder %s304, 1
        %s306 = scalar_select %p305, %s304, 1
        %s307 = smul.addr %s306, 8
        %s308 = smul.addr %s307, 8
        %s309 = scalar_lea.vmem %s5, %s308
        %s310 = smul.u32 2, %s25
        %v311 = vld [vmem:[%s1] sm:$0xff]
        %v312 = vld [vmem:[%s1 + $0x8] sm:$0xff]
        %v313 = vld [vmem:[%s2] sm:$0xff]
        %v314 = vld [vmem:[%s2 + $0x8] sm:$0xff]
        %v315 = vld [vmem:[%s300] sm:$0x1]
        %v316 = vld [vmem:[%s303] sm:$0x1]
        %s317 = smul.u32 %s25, 12
        %s318 = sld [smem:[#allocation2 + %s317]]
        %s319 = sadd.s32 %s317, 1
        %s320 = sld [smem:[#allocation2 + %s319]]
        %s321 = sadd.s32 %s317, 2
        %s322 = sld [smem:[#allocation2 + %s321]]
        %s323 = sadd.s32 %s317, 3
        %s324 = sld [smem:[#allocation2 + %s323]]
        %s325 = sadd.s32 %s317, 4
        %s326 = sld [smem:[#allocation2 + %s325]]
        %s327 = sadd.s32 %s317, 5
        %s328 = sld [smem:[#allocation2 + %s327]]
        %s329 = smul.f32 %s318, 8.0
        %s330 = smul.f32 %s320, 8.0
        %s331 = smul.f32 %s322, 8.0
        %s332 = sadd.f32 %s331, 7.5
        %s333 = smul.f32 %s324, 8.0
        %s334 = smul.f32 %s326, 8.0
        %s335 = smul.f32 %s328, 8.0
        %s336 = sadd.f32 %s335, 7.5
        %v337 = vstv %s329
        %v338 = vmul.f32 %v337, %v315
        %v339 = vstv %s330
        %v340 = vmul.f32 %v339, %v316
        %v341 = vadd.f32 %v338, %v340
        %v342 = vstv %s332
        %v343 = vadd.f32 %v341, %v342
        %v344 = vstv %s333
        %v345 = vmul.f32 %v344, %v315
        %v346 = vstv %s334
        %v347 = vmul.f32 %v346, %v316
        %v348 = vadd.f32 %v345, %v347
        %v349 = vstv %s336
        %v350 = vadd.f32 %v348, %v349
        %v352 = vlaneseq
        %v353 = vshrl.u32 %v352, 7
        %v354 = vsub.s32 0, %v353
        %v355 = vrot.slane %v343, %v354
        %358 = vset.pattern.permute.xlu0 0
        %359 = vperm.xlu0 %358, %v311
        %v360 = vpop.permute.xlu0 %359
        %363 = vset.pattern.permute.xlu0 0
        %364 = vperm.xlu0 %363, %v312
        %v365 = vpop.permute.xlu0 %364
        %v367 = vsub.f32 %v355, %v360
        %v368 = vsub.f32 %v355, %v365
        %v369 = vand.u32 2147483647, %v367
        %v370 = vand.u32 2147483647, %v368
        %v371 = vsub.f32 1.0, %v369
        %v372 = vsub.f32 1.0, %v370
        %v373 = vmax.f32 %v371, 0.0
        %v374 = vmax.f32 %v372, 0.0
        %v376 = vlaneseq
        %v377 = vshrl.u32 %v376, 7
        %v378 = vsub.s32 0, %v377
        %v379 = vrot.slane %v350, %v378
        %382 = vset.pattern.permute.xlu0 0
        %383 = vperm.xlu0 %382, %v313
        %v384 = vpop.permute.xlu0 %383
        %387 = vset.pattern.permute.xlu0 0
        %388 = vperm.xlu0 %387, %v314
        %v389 = vpop.permute.xlu0 %388
        %v391 = vsub.f32 %v379, %v384
        %v392 = vsub.f32 %v379, %v389
        %v393 = vand.u32 2147483647, %v391
        %v394 = vand.u32 2147483647, %v392
        %v395 = vsub.f32 1.0, %v393
        %v396 = vsub.f32 1.0, %v394
        %v397 = vmax.f32 %v395, 0.0
        %v398 = vmax.f32 %v396, 0.0
        %v399 = vld [vmem:[%s309] sm:$0xff]
        %v400 = vld [vmem:[%s309 + $0x8] sm:$0xff]
        %v401 = vld [vmem:[%s309 + $0x10] sm:$0xff]
        %v402 = vld [vmem:[%s309 + $0x18] sm:$0xff]
        %v403 = vld [vmem:[%s309 + $0x20] sm:$0xff]
        %v404 = vld [vmem:[%s309 + $0x28] sm:$0xff]
        %v405 = vld [vmem:[%s309 + $0x30] sm:$0xff]
        %v406 = vld [vmem:[%s309 + $0x38] sm:$0xff]
        %vm407 = vcmask 130048
        %v409 = vsel %vm407, %v399, 0
        %v412 = vsel %vm407, %v400, 0
        %v415 = vsel %vm407, %v401, 0
        %v418 = vsel %vm407, %v402, 0
        %v421 = vsel %vm407, %v403, 0
        %v424 = vsel %vm407, %v404, 0
        %v427 = vsel %vm407, %v405, 0
        %v430 = vsel %vm407, %v406, 0
        %432 = vmatprep.subr.mxu0 0.0
        %433 = vmatpush1.msra.mxu0 %v373
        %434 = vmatprep.subr.mxu0 0.0
        %435 = vmatpush1.msra.mxu0 %v374
        %436 = vmatprep.subr.mxu0 0.0
        %437 = vmatpush1.msra.mxu0 0.0
        %438 = vmatprep.subr.mxu0 0.0
        %439 = vmatpush1.msra.mxu0 0.0
        %440 = vmatprep.subr.mxu0 0.0
        %441 = vmatpush1.msra.mxu0 0.0
        %442 = vmatprep.subr.mxu0 0.0
        %443 = vmatpush1.msra.mxu0 0.0
        %444 = vmatprep.subr.mxu0 0.0
        %445 = vmatpush1.msra.mxu0 0.0
        %446 = vmatprep.subr.mxu0 0.0
        %447 = vmatpush1.msra.mxu0 0.0
        %448 = vmatprep.subr.mxu0 0.0
        %449 = vmatpush1.msra.mxu0 0.0
        %450 = vmatprep.subr.mxu0 0.0
        %451 = vmatpush1.msra.mxu0 0.0
        %452 = vmatprep.subr.mxu0 0.0
        %453 = vmatpush1.msra.mxu0 0.0
        %454 = vmatprep.subr.mxu0 0.0
        %455 = vmatpush1.msra.mxu0 0.0
        %456 = vmatprep.subr.mxu0 0.0
        %457 = vmatpush1.msra.mxu0 0.0
        %458 = vmatprep.subr.mxu0 0.0
        %459 = vmatpush1.msra.mxu0 0.0
        %460 = vmatprep.subr.mxu0 0.0
        %461 = vmatpush1.msra.mxu0 0.0
        %462 = vmatprep.subr.mxu0 0.0
        %463 = vmatpush1.msra.mxu0 0.0
        %464 = vmatprep.subr.mxu0 0.0
        %465 = vmatpush1.msra.mxu0 0.0
        %466 = vmatprep.subr.mxu0 0.0
        %467 = vmatpush1.msra.mxu0 0.0
        %468 = vmatprep.subr.mxu0 0.0
        %469 = vmatpush1.msra.mxu0 0.0
        %470 = vmatprep.subr.mxu0 0.0
        %471 = vmatpush1.msra.mxu0 0.0
        %472 = vmatprep.subr.mxu0 0.0
        %473 = vmatpush1.msra.mxu0 0.0
        %474 = vmatprep.subr.mxu0 0.0
        %475 = vmatpush1.msra.mxu0 0.0
        %476 = vmatprep.subr.mxu0 0.0
        %477 = vmatpush1.msra.mxu0 0.0
        %478 = vmatprep.subr.mxu0 0.0
        %479 = vmatpush1.msra.mxu0 0.0
        %480 = vmatprep.subr.mxu0 0.0
        %481 = vmatpush1.msra.mxu0 0.0
        %482 = vmatprep.subr.mxu0 0.0
        %483 = vmatpush1.msra.mxu0 0.0
        %484 = vmatprep.subr.mxu0 0.0
        %485 = vmatpush1.msra.mxu0 0.0
        %486 = vmatprep.subr.mxu0 0.0
        %487 = vmatpush1.msra.mxu0 0.0
        %488 = vmatprep.subr.mxu0 0.0
        %489 = vmatpush1.msra.mxu0 0.0
        %490 = vmatprep.subr.mxu0 0.0
        %491 = vmatpush1.msra.mxu0 0.0
        %492 = vmatprep.subr.mxu0 0.0
        %493 = vmatpush1.msra.mxu0 0.0
        %494 = vmatprep.subr.mxu0 0.0
        %495 = vmatpush1.msra.mxu0 0.0
        %496 = vmatprep.mubr.f32.mxu0 0.0
        %497 = vmatmul.mubr.f32.gmra.mrb[0].mxu0 %v409
        %v498 = vpop.f32.mrb[0].mxu0
        %v499 = vadd.f32 0.0, %v498
        %v500 = vpop.f32.mrb[0].mxu0
        %501 = vmatprep.mubr.f32.mxu0 0.0
        %502 = vmatmul.mubr.f32.gmra.mrb[0].mxu0 %v412
        %v503 = vpop.f32.mrb[0].mxu0
        %v504 = vadd.f32 0.0, %v503
        %v505 = vpop.f32.mrb[0].mxu0
        %506 = vmatprep.mubr.f32.mxu0 0.0
        %507 = vmatmul.mubr.f32.gmra.mrb[0].mxu0 %v415
        %v508 = vpop.f32.mrb[0].mxu0
        %v509 = vadd.f32 0.0, %v508
        %v510 = vpop.f32.mrb[0].mxu0
        %511 = vmatprep.mubr.f32.mxu0 0.0
        %512 = vmatmul.mubr.f32.gmra.mrb[0].mxu0 %v418
        %v513 = vpop.f32.mrb[0].mxu0
        %v514 = vadd.f32 0.0, %v513
        %v515 = vpop.f32.mrb[0].mxu0
        %516 = vmatprep.mubr.f32.mxu0 0.0
        %517 = vmatmul.mubr.f32.gmra.mrb[0].mxu0 %v421
        %v518 = vpop.f32.mrb[0].mxu0
        %v519 = vadd.f32 0.0, %v518
        %v520 = vpop.f32.mrb[0].mxu0
        %521 = vmatprep.mubr.f32.mxu0 0.0
        %522 = vmatmul.mubr.f32.gmra.mrb[0].mxu0 %v424
        %v523 = vpop.f32.mrb[0].mxu0
        %v524 = vadd.f32 0.0, %v523
        %v525 = vpop.f32.mrb[0].mxu0
        %526 = vmatprep.mubr.f32.mxu0 0.0
        %527 = vmatmul.mubr.f32.gmra.mrb[0].mxu0 %v427
        %v528 = vpop.f32.mrb[0].mxu0
        %v529 = vadd.f32 0.0, %v528
        %v530 = vpop.f32.mrb[0].mxu0
        %531 = vmatprep.mubr.f32.mxu0 0.0
        %532 = vmatmul.mubr.f32.gmra.mrb[0].mxu0 %v430
        %v533 = vpop.f32.mrb[0].mxu0
        %v534 = vadd.f32 0.0, %v533
        %v535 = vpop.f32.mrb[0].mxu0
        %536 = vdwg.mxu0
        %v537 = vmul.f32 %v499, %v397
        %v538 = vmul.f32 %v504, %v398
        %v539 = vmul.f32 %v509, %v397
        %v540 = vmul.f32 %v514, %v398
        %v541 = vmul.f32 %v519, %v397
        %v542 = vmul.f32 %v524, %v398
        %v543 = vmul.f32 %v529, %v397
        %v544 = vmul.f32 %v534, %v398
        %v545 = vadd.f32 %v537, %v538
        %v546 = vrot.slane %v545, 4
        %v547 = vadd.f32 %v545, %v546
        %v548 = vrot.slane %v547, 2
        %v549 = vadd.f32 %v547, %v548
        %v550 = vrot.slane %v549, 1
        %v551 = vadd.f32 %v549, %v550
        %v552 = vadd.f32 %v539, %v540
        %v553 = vrot.slane %v552, 4
        %v554 = vadd.f32 %v552, %v553
        %v555 = vrot.slane %v554, 2
        %v556 = vadd.f32 %v554, %v555
        %v557 = vrot.slane %v556, 1
        %v558 = vadd.f32 %v556, %v557
        %v559 = vadd.f32 %v541, %v542
        %v560 = vrot.slane %v559, 4
        %v561 = vadd.f32 %v559, %v560
        %v562 = vrot.slane %v561, 2
        %v563 = vadd.f32 %v561, %v562
        %v564 = vrot.slane %v563, 1
        %v565 = vadd.f32 %v563, %v564
        %v566 = vadd.f32 %v543, %v544
        %v567 = vrot.slane %v566, 4
        %v568 = vadd.f32 %v566, %v567
        %v569 = vrot.slane %v568, 2
        %v570 = vadd.f32 %v568, %v569
        %v571 = vrot.slane %v570, 1
        %v572 = vadd.f32 %v570, %v571
        %vm577 = vcmask 1041409
        %v578 = vsel %vm577, %v558, %v551
        %vm579 = vcmask 1042434
        %v580 = vsel %vm579, %v565, %v578
        %vm581 = vcmask 1043459
        %v582 = vsel %vm581, %v572, %v580
        %584 = vst [vmem:[%s297] sm:$0xf] %v582
        %s585 = smul.u32 %s25, 2
        %s586 = sadd.s32 %s585, 1
        %s587 = smul.u32 %s586, 6
        %s588 = sld [smem:[#allocation2 + %s587]]
        %s589 = sadd.s32 %s587, 1
        %s590 = sld [smem:[#allocation2 + %s589]]
        %s591 = sadd.s32 %s587, 2
        %s592 = sld [smem:[#allocation2 + %s591]]
        %s593 = sadd.s32 %s587, 3
        %s594 = sld [smem:[#allocation2 + %s593]]
        %s595 = sadd.s32 %s587, 4
        %s596 = sld [smem:[#allocation2 + %s595]]
        %s597 = sadd.s32 %s587, 5
        %s598 = sld [smem:[#allocation2 + %s597]]
        %s599 = smul.f32 %s588, 8.0
        %s600 = smul.f32 %s590, 8.0
        %s601 = smul.f32 %s592, 8.0
        %s602 = sadd.f32 %s601, 7.5
        %s603 = smul.f32 %s594, 8.0
        %s604 = smul.f32 %s596, 8.0
        %s605 = smul.f32 %s598, 8.0
        %s606 = sadd.f32 %s605, 7.5
        %v607 = vstv %s599
        %v608 = vmul.f32 %v607, %v315
        %v609 = vstv %s600
        %v610 = vmul.f32 %v609, %v316
        %v611 = vadd.f32 %v608, %v610
        %v612 = vstv %s602
        %v613 = vadd.f32 %v611, %v612
        %v614 = vstv %s603
        %v615 = vmul.f32 %v614, %v315
        %v616 = vstv %s604
        %v617 = vmul.f32 %v616, %v316
        %v618 = vadd.f32 %v615, %v617
        %v619 = vstv %s606
        %v620 = vadd.f32 %v618, %v619
        %v622 = vlaneseq
        %v623 = vshrl.u32 %v622, 7
        %v624 = vsub.s32 0, %v623
        %v625 = vrot.slane %v613, %v624
        %v627 = vsub.f32 %v625, %v360
        %v628 = vsub.f32 %v625, %v365
        %v629 = vand.u32 2147483647, %v627
        %v630 = vand.u32 2147483647, %v628
        %v631 = vsub.f32 1.0, %v629
        %v632 = vsub.f32 1.0, %v630
        %v633 = vmax.f32 %v631, 0.0
        %v634 = vmax.f32 %v632, 0.0
        %v636 = vlaneseq
        %v637 = vshrl.u32 %v636, 7
        %v638 = vsub.s32 0, %v637
        %v639 = vrot.slane %v620, %v638
        %v641 = vsub.f32 %v639, %v384
        %v642 = vsub.f32 %v639, %v389
        %v643 = vand.u32 2147483647, %v641
        %v644 = vand.u32 2147483647, %v642
        %v645 = vsub.f32 1.0, %v643
        %v646 = vsub.f32 1.0, %v644
        %v647 = vmax.f32 %v645, 0.0
        %v648 = vmax.f32 %v646, 0.0
        %s649 = scalar_lea.vmem %s309, 64
        %v650 = vld [vmem:[%s649] sm:$0xff]
        %v651 = vld [vmem:[%s649 + $0x8] sm:$0xff]
        %v652 = vld [vmem:[%s649 + $0x10] sm:$0xff]
        %v653 = vld [vmem:[%s649 + $0x18] sm:$0xff]
        %v654 = vld [vmem:[%s649 + $0x20] sm:$0xff]
        %v655 = vld [vmem:[%s649 + $0x28] sm:$0xff]
        %v656 = vld [vmem:[%s649 + $0x30] sm:$0xff]
        %v657 = vld [vmem:[%s649 + $0x38] sm:$0xff]
        %v659 = vsel %vm407, %v650, 0
        %v662 = vsel %vm407, %v651, 0
        %v665 = vsel %vm407, %v652, 0
        %v668 = vsel %vm407, %v653, 0
        %v671 = vsel %vm407, %v654, 0
        %v674 = vsel %vm407, %v655, 0
        %v677 = vsel %vm407, %v656, 0
        %v680 = vsel %vm407, %v657, 0
        %682 = vmatprep.subr.mxu0 0.0
        %683 = vmatpush1.msra.mxu0 %v633
        %684 = vmatprep.subr.mxu0 0.0
        %685 = vmatpush1.msra.mxu0 %v634
        %686 = vmatprep.subr.mxu0 0.0
        %687 = vmatpush1.msra.mxu0 0.0
        %688 = vmatprep.subr.mxu0 0.0
        %689 = vmatpush1.msra.mxu0 0.0
        %690 = vmatprep.subr.mxu0 0.0
        %691 = vmatpush1.msra.mxu0 0.0
        %692 = vmatprep.subr.mxu0 0.0
        %693 = vmatpush1.msra.mxu0 0.0
        %694 = vmatprep.subr.mxu0 0.0
        %695 = vmatpush1.msra.mxu0 0.0
        %696 = vmatprep.subr.mxu0 0.0
        %697 = vmatpush1.msra.mxu0 0.0
        %698 = vmatprep.subr.mxu0 0.0
        %699 = vmatpush1.msra.mxu0 0.0
        %700 = vmatprep.subr.mxu0 0.0
        %701 = vmatpush1.msra.mxu0 0.0
        %702 = vmatprep.subr.mxu0 0.0
        %703 = vmatpush1.msra.mxu0 0.0
        %704 = vmatprep.subr.mxu0 0.0
        %705 = vmatpush1.msra.mxu0 0.0
        %706 = vmatprep.subr.mxu0 0.0
        %707 = vmatpush1.msra.mxu0 0.0
        %708 = vmatprep.subr.mxu0 0.0
        %709 = vmatpush1.msra.mxu0 0.0
        %710 = vmatprep.subr.mxu0 0.0
        %711 = vmatpush1.msra.mxu0 0.0
        %712 = vmatprep.subr.mxu0 0.0
        %713 = vmatpush1.msra.mxu0 0.0
        %714 = vmatprep.subr.mxu0 0.0
        %715 = vmatpush1.msra.mxu0 0.0
        %716 = vmatprep.subr.mxu0 0.0
        %717 = vmatpush1.msra.mxu0 0.0
        %718 = vmatprep.subr.mxu0 0.0
        %719 = vmatpush1.msra.mxu0 0.0
        %720 = vmatprep.subr.mxu0 0.0
        %721 = vmatpush1.msra.mxu0 0.0
        %722 = vmatprep.subr.mxu0 0.0
        %723 = vmatpush1.msra.mxu0 0.0
        %724 = vmatprep.subr.mxu0 0.0
        %725 = vmatpush1.msra.mxu0 0.0
        %726 = vmatprep.subr.mxu0 0.0
        %727 = vmatpush1.msra.mxu0 0.0
        %728 = vmatprep.subr.mxu0 0.0
        %729 = vmatpush1.msra.mxu0 0.0
        %730 = vmatprep.subr.mxu0 0.0
        %731 = vmatpush1.msra.mxu0 0.0
        %732 = vmatprep.subr.mxu0 0.0
        %733 = vmatpush1.msra.mxu0 0.0
        %734 = vmatprep.subr.mxu0 0.0
        %735 = vmatpush1.msra.mxu0 0.0
        %736 = vmatprep.subr.mxu0 0.0
        %737 = vmatpush1.msra.mxu0 0.0
        %738 = vmatprep.subr.mxu0 0.0
        %739 = vmatpush1.msra.mxu0 0.0
        %740 = vmatprep.subr.mxu0 0.0
        %741 = vmatpush1.msra.mxu0 0.0
        %742 = vmatprep.subr.mxu0 0.0
        %743 = vmatpush1.msra.mxu0 0.0
        %744 = vmatprep.subr.mxu0 0.0
        %745 = vmatpush1.msra.mxu0 0.0
        %746 = vmatprep.mubr.f32.mxu0 0.0
        %747 = vmatmul.mubr.f32.gmra.mrb[0].mxu0 %v659
        %v748 = vpop.f32.mrb[0].mxu0
        %v749 = vadd.f32 0.0, %v748
        %v750 = vpop.f32.mrb[0].mxu0
        %751 = vmatprep.mubr.f32.mxu0 0.0
        %752 = vmatmul.mubr.f32.gmra.mrb[0].mxu0 %v662
        %v753 = vpop.f32.mrb[0].mxu0
        %v754 = vadd.f32 0.0, %v753
        %v755 = vpop.f32.mrb[0].mxu0
        %756 = vmatprep.mubr.f32.mxu0 0.0
        %757 = vmatmul.mubr.f32.gmra.mrb[0].mxu0 %v665
        %v758 = vpop.f32.mrb[0].mxu0
        %v759 = vadd.f32 0.0, %v758
        %v760 = vpop.f32.mrb[0].mxu0
        %761 = vmatprep.mubr.f32.mxu0 0.0
        %762 = vmatmul.mubr.f32.gmra.mrb[0].mxu0 %v668
        %v763 = vpop.f32.mrb[0].mxu0
        %v764 = vadd.f32 0.0, %v763
        %v765 = vpop.f32.mrb[0].mxu0
        %766 = vmatprep.mubr.f32.mxu0 0.0
        %767 = vmatmul.mubr.f32.gmra.mrb[0].mxu0 %v671
        %v768 = vpop.f32.mrb[0].mxu0
        %v769 = vadd.f32 0.0, %v768
        %v770 = vpop.f32.mrb[0].mxu0
        %771 = vmatprep.mubr.f32.mxu0 0.0
        %772 = vmatmul.mubr.f32.gmra.mrb[0].mxu0 %v674
        %v773 = vpop.f32.mrb[0].mxu0
        %v774 = vadd.f32 0.0, %v773
        %v775 = vpop.f32.mrb[0].mxu0
        %776 = vmatprep.mubr.f32.mxu0 0.0
        %777 = vmatmul.mubr.f32.gmra.mrb[0].mxu0 %v677
        %v778 = vpop.f32.mrb[0].mxu0
        %v779 = vadd.f32 0.0, %v778
        %v780 = vpop.f32.mrb[0].mxu0
        %781 = vmatprep.mubr.f32.mxu0 0.0
        %782 = vmatmul.mubr.f32.gmra.mrb[0].mxu0 %v680
        %v783 = vpop.f32.mrb[0].mxu0
        %v784 = vadd.f32 0.0, %v783
        %v785 = vpop.f32.mrb[0].mxu0
        %786 = vdwg.mxu0
        %v787 = vmul.f32 %v749, %v647
        %v788 = vmul.f32 %v754, %v648
        %v789 = vmul.f32 %v759, %v647
        %v790 = vmul.f32 %v764, %v648
        %v791 = vmul.f32 %v769, %v647
        %v792 = vmul.f32 %v774, %v648
        %v793 = vmul.f32 %v779, %v647
        %v794 = vmul.f32 %v784, %v648
        %v795 = vadd.f32 %v787, %v788
        %v796 = vrot.slane %v795, 4
        %v797 = vadd.f32 %v795, %v796
        %v798 = vrot.slane %v797, 2
        %v799 = vadd.f32 %v797, %v798
        %v800 = vrot.slane %v799, 1
        %v801 = vadd.f32 %v799, %v800
        %v802 = vadd.f32 %v789, %v790
        %v803 = vrot.slane %v802, 4
        %v804 = vadd.f32 %v802, %v803
        %v805 = vrot.slane %v804, 2
        %v806 = vadd.f32 %v804, %v805
        %v807 = vrot.slane %v806, 1
        %v808 = vadd.f32 %v806, %v807
        %v809 = vadd.f32 %v791, %v792
        %v810 = vrot.slane %v809, 4
        %v811 = vadd.f32 %v809, %v810
        %v812 = vrot.slane %v811, 2
        %v813 = vadd.f32 %v811, %v812
        %v814 = vrot.slane %v813, 1
        %v815 = vadd.f32 %v813, %v814
        %v816 = vadd.f32 %v793, %v794
        %v817 = vrot.slane %v816, 4
        %v818 = vadd.f32 %v816, %v817
        %v819 = vrot.slane %v818, 2
        %v820 = vadd.f32 %v818, %v819
        %v821 = vrot.slane %v820, 1
        %v822 = vadd.f32 %v820, %v821
        %v827 = vsel %vm577, %v808, %v801
        %v828 = vsel %vm579, %v815, %v827
        %v829 = vsel %vm581, %v822, %v828
        %831 = vst [vmem:[%s297 + $0x4] sm:$0xf] %v829
        %s832 = sand.u32 %s184, 1
        %s833 = scalar_lea.sflag [#allocation3], %s832
        %s834 = sand.u32 %s184, 1
        %s835 = smul.addr %s834, 8
        %s836 = scalar_lea.vmem [#allocation5], %s835
        // Predicated region
        $region49: #{tpu_custom_call.1} parent=43 // pred_check
          %p837 = pneg %p194
        $region50: #{tpu_custom_call.1} parent=43 // pred_check_branch
          %839 = sbr.rel (%p837) target = $region52
        $region51: #{tpu_custom_call.1} parent=43 // pred_region
          %s841 = ssub.s32 128, 128
          %842 = vsyncadd %s833, %s841
          %s843 = smul.addr %s25, 2
          %s844 = sadd.s32 %s26, %s843
          %s845 = smul.addr %s844, 128
          %s846 = scalar_lea.hbm %s6, %s845
          %s848 = sshll.u32 %s836, 4
          %s849 = int_to_ptr.vmem [resolvable:$true] %s848
          %851 = dma.vmem_to_hbm [thread:$0]  %s849, 128, %s846, %s833
        $region52: #{tpu_custom_call.1} parent=43 // pred_fallthru
          _
      $region44: #{tpu_custom_call.1} parent=5 // pred_fallthru
        _
      %p852 = scmp.le.s32.totalorder 2, %s16
      // Predicated region
      $region53: #{tpu_custom_call.1} parent=5 // pred_check
        %p853 = pneg %p852
      $region54: #{tpu_custom_call.1} parent=5 // pred_check_branch
        %855 = sbr.rel (%p853) target = $region56
      $region55: #{tpu_custom_call.1} parent=5 // pred_region
        %s856 = ssub.s32 %s16, 2
        // Predicated region
        $region57: #{tpu_custom_call.1} parent=55 // pred_check
          %p857 = pneg %p200
        $region58: #{tpu_custom_call.1} parent=55 // pred_check_branch
          %859 = sbr.rel (%p857) target = $region60
        $region59: #{tpu_custom_call.1} parent=55 // pred_region
          %s860 = sand.u32 %s185, 1
          %s861 = scalar_lea.sflag [#allocation3], %s860
          %s862 = sand.u32 %s185, 1
          %s863 = smul.addr %s862, 8
          %s864 = scalar_lea.vmem [#allocation5], %s863
          %865 = dma.done %s861, 128
        $region60: #{tpu_custom_call.1} parent=55 // pred_fallthru
          _
      $region56: #{tpu_custom_call.1} parent=5 // pred_fallthru
        _
    $region6: #{tpu_custom_call.1} parent=1 // loop_footer
      %s20 = sadd.s32 1, %s16
    $region7: #{tpu_custom_call.1} parent=1 // loop_footer_branch
      %15 = sbr.rel target = $region3
    $region8: #{tpu_custom_call.1} parent=1 // loop_exit
      _
    %866 = vsyncpa [#allocation3], 1
    %s867 = scalar_lea.sflag [#allocation3], 1
    %868 = vsyncpa %s867, 1
    %869 = vsyncpa [#allocation4], 1
    %s870 = scalar_lea.sflag [#allocation4], 1
    %871 = vsyncpa %s870, 1

</llo_original>
